<compile_context>
chip_gen: v7x
topology: tpu7x:2x2x1
jax: 0.10.0
libtpu: 0.0.40
codegen_flags: <defaults>
</compile_context>

<pallas_src>
import functools

import jax
import jax.numpy as jnp
from jax import lax
from jax.experimental import pallas as pl
from jax.experimental.pallas import tpu as pltpu

ENCODER_REGULAR_VTH = 0.999

_LANE = 128


def _round_up(x, m):
    return (x + m - 1) // m * m


def _encoder_kernel(obs3_ref, sel3_ref, mean_ref, scale_ref, out_ref,
                    volt_ref, act_ref, *, t_chunk, sub_rows):
    """One (batch-tile, neuron-tile, time-chunk) grid step.

    obs3_ref:  (bt, D3)   bf16  [obs_hi | obs_mid | obs_lo] split of obs
    sel3_ref:  (D3, nt)   bf16  0/1 selection matrix (obs feature -> neuron)
    mean_ref:  (1,  nt)   f32   flattened population means
    scale_ref: (1,  nt)   f32   -0.5 / std**2, flattened
    out_ref:   (t_chunk, bt, nt) spike train block (lane-dense stores)
    volt_ref:  (bt, nt)   f32   VMEM scratch, persists across the time axis
    act_ref:   (bt, nt)   f32   VMEM scratch, persists across the time axis
    """
    t_idx = pl.program_id(2)

    @pl.when(t_idx == 0)
    def _():
        # Replicate each observation feature across its population on the
        # (otherwise idle) MXU.  The 3-way bf16 split reconstructs the f32
        # observation to ~2^-24 relative error under f32 MXU accumulation.
        obs_rep = jnp.dot(obs3_ref[...], sel3_ref[...],
                          preferred_element_type=jnp.float32)       # (bt, nt)
        diff = obs_rep - mean_ref[...]
        act_ref[...] = jnp.exp(scale_ref[...] * diff * diff)
        volt_ref[...] = jnp.zeros_like(volt_ref)

    bt = volt_ref.shape[0]
    n_sub = bt // sub_rows

    # Walk the block in sublane-tile-sized row groups so the voltage carry and
    # the activation stay vreg-resident across the whole time chunk; the only
    # per-step VMEM traffic is the (full, unmasked) spike store.
    @pl.loop(0, n_sub)
    def _(s):
        row0 = pl.multiple_of(s * sub_rows, sub_rows)
        act = act_ref[pl.ds(row0, sub_rows), :]
        volt0 = volt_ref[pl.ds(row0, sub_rows), :]

        def step(tt, volt):
            volt = volt + act
            pred = volt > ENCODER_REGULAR_VTH
            out_ref[tt, pl.ds(row0, sub_rows), :] = pred.astype(out_ref.dtype)
            return jnp.where(pred, volt - ENCODER_REGULAR_VTH, volt)

        volt = lax.fori_loop(0, t_chunk, step, volt0, unroll=True)
        volt_ref[pl.ds(row0, sub_rows), :] = volt


def pop_spike_encoder_regular_native(obs, mean, std, spike_ts, *,
                                     out_dtype=jnp.bfloat16):
    """Forward pass of PopSpikeEncoderRegularSpike (TPU-native layout).

    obs:  (batch, obs_dim)
    mean: (1, obs_dim, pop_dim)   learnable parameter
    std:  (1, obs_dim, pop_dim)   learnable parameter

    Returns pop_spikes of shape (spike_ts, batch, obs_dim * pop_dim); values
    are exactly 0.0 / 1.0 (bf16 by default -> lossless, half the HBM bytes;
    int8 also lossless and half again).
    """
    obs = obs.astype(jnp.float32)
    batch, obs_dim = obs.shape
    _, _, pop_dim = mean.shape
    neurons = obs_dim * pop_dim

    out_itemsize = jnp.dtype(out_dtype).itemsize
    sub = 8 * max(1, 4 // out_itemsize)      # 8 (f32) / 16 (bf16) / 32 (int8)

    # ---- neuron tiling: lane-dense multiples of 128 --------------------------
    n_pad = _round_up(neurons, _LANE)
    nt = _LANE
    for cand in (512, 384, 256):
        if n_pad % cand == 0:
            nt = cand
            break
    grid_j = n_pad // nt

    # ---- time chunking: VMEM footprint independent of spike_ts ---------------
    t_chunk = min(spike_ts, 16)
    grid_t = pl.cdiv(spike_ts, t_chunk)

    # ---- batch tiling ---------------------------------------------------------
    bt = 256
    while bt > sub and bt >= 2 * _round_up(batch, sub):
        bt //= 2                                   # don't vastly exceed batch
    budget = 8 * 1024 * 1024                       # double-buffered out tile
    while bt > sub and 2 * t_chunk * bt * nt * out_itemsize > budget:
        bt //= 2
    # v7x megacore: if the parallel (i, j) grid would be a single step, halve
    # the batch tile (when batch allows) so both TensorCores get work.
    while pl.cdiv(batch, bt) * grid_j < 2 and bt > sub and batch > bt // 2:
        bt //= 2
    grid_i = pl.cdiv(batch, bt)
    b_pad = grid_i * bt

    # ---- small host-side prep (all O(N) or O(B*obs_dim), no (B,N) arrays) ----
    # 3-way bf16 split so the bf16 selection matmul reproduces f32 obs values.
    obs_hi = obs.astype(jnp.bfloat16)
    r1 = obs - obs_hi.astype(jnp.float32)
    obs_mid = r1.astype(jnp.bfloat16)
    r2 = r1 - obs_mid.astype(jnp.float32)
    obs_lo = r2.astype(jnp.bfloat16)

    d3 = 3 * obs_dim
    d3_pad = _round_up(d3, 16)
    obs3 = jnp.pad(jnp.concatenate([obs_hi, obs_mid, obs_lo], axis=1),
                   ((0, b_pad - batch), (0, d3_pad - d3)))           # (Bp, D3)

    owner = jnp.arange(neurons, dtype=jnp.int32) // pop_dim           # (N,)
    feat = jnp.arange(obs_dim, dtype=jnp.int32)
    sel = (owner[None, :] == feat[:, None]).astype(jnp.bfloat16)      # (D, N)
    sel3 = jnp.pad(jnp.concatenate([sel, sel, sel], axis=0),
                   ((0, d3_pad - d3), (0, n_pad - neurons)))          # (D3, Np)

    mean_flat = jnp.pad(mean.astype(jnp.float32).reshape(1, neurons),
                        ((0, 0), (0, n_pad - neurons)))
    scale_flat = jnp.pad((-0.5 / (std.astype(jnp.float32) ** 2)
                          ).reshape(1, neurons),
                         ((0, 0), (0, n_pad - neurons)))

    # ---- explicit VMEM budget (generation-aware: raises v5e's 16 MiB default,
    #      stays well under v7x's 64 MiB physical) ------------------------------
    out_buf = 2 * t_chunk * bt * nt * out_itemsize
    in_buf = 2 * (bt * d3_pad + d3_pad * nt) * 2 + 2 * 2 * nt * 4
    scratch_buf = 2 * bt * nt * 4
    vmem_need = out_buf + in_buf + scratch_buf
    vmem_limit = int(min(max(2 * vmem_need, 32 << 20), 48 << 20))

    kernel = functools.partial(_encoder_kernel, t_chunk=t_chunk, sub_rows=sub)

    out = pl.pallas_call(
        kernel,
        # Exact output shape: Pallas clips edge-block write-back, so no
        # post-kernel slice re-reading the whole spike train.
        out_shape=jax.ShapeDtypeStruct((spike_ts, batch, neurons), out_dtype),
        grid=(grid_i, grid_j, grid_t),
        in_specs=[
            pl.BlockSpec((bt, d3_pad), lambda i, j, t: (i, 0)),   # obs splits
            pl.BlockSpec((d3_pad, nt), lambda i, j, t: (0, j)),   # selection
            pl.BlockSpec((1, nt), lambda i, j, t: (0, j)),        # means
            pl.BlockSpec((1, nt), lambda i, j, t: (0, j)),        # -0.5/std^2
        ],
        out_specs=pl.BlockSpec((t_chunk, bt, nt), lambda i, j, t: (t, i, j)),
        scratch_shapes=[
            pltpu.VMEM((bt, nt), jnp.float32),    # voltage carry
            pltpu.VMEM((bt, nt), jnp.float32),    # population activation
        ],
        compiler_params=pltpu.CompilerParams(
            dimension_semantics=("parallel", "parallel", "arbitrary"),
            vmem_limit_bytes=vmem_limit),
    )(obs3, sel3, mean_flat, scale_flat)
    return out


def pop_spike_encoder_regular(obs, mean, std, spike_ts, *,
                              out_dtype=jnp.bfloat16):
    """PyTorch-layout wrapper: returns (batch, neurons, spike_ts).

    NOTE: the transpose re-reads/re-writes the entire spike train in HBM and
    roughly triples the bytes of this memory-bound op; prefer
    `pop_spike_encoder_regular_native` when the consumer can accept the
    (spike_ts, batch, neurons) layout.
    """
    out = pop_spike_encoder_regular_native(obs, mean, std, spike_ts,
                                           out_dtype=out_dtype)
    return jnp.transpose(out, (1, 2, 0))


def _reference(obs, mean, std, spike_ts):
    """Pure-JAX reference mirroring the PyTorch forward (f32, torch layout)."""
    batch, obs_dim = obs.shape
    pop_dim = mean.shape[-1]
    pop_act = jnp.exp(-0.5 * (obs[:, :, None] - mean) ** 2 / std ** 2)
    pop_act = pop_act.reshape(batch, obs_dim * pop_dim)
    volt = jnp.zeros_like(pop_act)
    spikes = []
    for _ in range(spike_ts):
        volt = volt + pop_act
        spk = (volt > ENCODER_REGULAR_VTH).astype(jnp.float32)
        spikes.append(spk)
        volt = volt - spk * ENCODER_REGULAR_VTH
    return jnp.stack(spikes, axis=-1)     # (B, N, T)


if __name__ == "__main__":
    # small, module-consistent shapes
    batch, obs_dim, pop_dim, spike_ts = 2, 4, 8, 8
    mean_range, std_val = (-3.0, 3.0), 0.15

    key = jax.random.PRNGKey(0)
    obs = jax.random.normal(key, (batch, obs_dim), dtype=jnp.float32)

    # deterministic parameter init, exactly as in the module __init__
    delta_mean = (mean_range[1] - mean_range[0]) / (pop_dim - 1)
    mean_row = mean_range[0] + delta_mean * jnp.arange(pop_dim, dtype=jnp.float32)
    mean = jnp.broadcast_to(mean_row[None, None, :], (1, obs_dim, pop_dim))
    std = jnp.full((1, obs_dim, pop_dim), std_val, dtype=jnp.float32)

    neurons = obs_dim * pop_dim

    # native (TPU-friendly) layout: (spike_ts, batch, neurons), bf16 0/1 spikes
    spikes_native = pop_spike_encoder_regular_native(obs, mean, std, spike_ts)
    jax.block_until_ready(spikes_native)
    assert spikes_native.shape == (spike_ts, batch, neurons)
    assert spikes_native.dtype == jnp.bfloat16

    # PyTorch-layout compatibility path: (batch, neurons, spike_ts)
    spikes_torch = pop_spike_encoder_regular(obs, mean, std, spike_ts)
    jax.block_until_ready(spikes_torch)
    assert spikes_torch.shape == (batch, neurons, spike_ts)

    ref = _reference(obs, mean, std, spike_ts)                        # (B,N,T)
    got = jnp.transpose(spikes_native, (1, 2, 0)).astype(jnp.float32)
    mismatch = float(jnp.mean(jnp.abs(got - ref)))
    mismatch_t = float(jnp.mean(jnp.abs(spikes_torch.astype(jnp.float32) - ref)))
    assert mismatch < 1e-2, f"native mismatch too high: {mismatch}"
    assert mismatch_t < 1e-2, f"torch-layout mismatch too high: {mismatch_t}"

    print("KERNEL_OK")
</pallas_src>

<mosaic_0001>
module attributes {stable_mosaic.version = 11 : i64} {
  func.func @_encoder_kernel(%arg0: i32, %arg1: i32, %arg2: i32, %arg3: memref<16x16xbf16, #tpu.memory_space<vmem>>, %arg4: memref<16x128xbf16, #tpu.memory_space<vmem>>, %arg5: memref<1x128xf32, #tpu.memory_space<vmem>>, %arg6: memref<1x128xf32, #tpu.memory_space<vmem>>, %arg7: memref<8x16x128xbf16, #tpu.memory_space<vmem>>, %arg8: memref<16x128xf32, #tpu.memory_space<vmem>>, %arg9: memref<16x128xf32, #tpu.memory_space<vmem>>) attributes {dimension_semantics = [#tpu.dimension_semantics<parallel>, #tpu.dimension_semantics<parallel>, #tpu.dimension_semantics<arbitrary>], iteration_bounds = array<i64: 1, 1, 1>, scalar_prefetch = 0 : i64, scratch_operands = 2 : i64, tpu.core_type = #tpu.core_type<tc>, window_params = [{transform_indices = @transform_0, window_bounds = array<i64: 16, 16>}, {transform_indices = @transform_1, window_bounds = array<i64: 16, 128>}, {transform_indices = @transform_2, window_bounds = array<i64: 1, 128>}, {transform_indices = @transform_3, window_bounds = array<i64: 1, 128>}, {transform_indices = @transform_4, window_bounds = array<i64: 8, 16, 128>}]} {
    %c0_i32 = arith.constant 0 : i32
    %0 = arith.cmpi eq, %arg2, %c0_i32 : i32
    %1 = arith.extui %0 : i1 to i32
    %c0_i32_0 = arith.constant 0 : i32
    %2 = arith.cmpi ne, %1, %c0_i32_0 : i32
    scf.if %2 {
      %c0_31 = arith.constant 0 : index
      %c0_32 = arith.constant 0 : index
      %125 = vector.load %arg3[%c0_31, %c0_32] : memref<16x16xbf16, #tpu.memory_space<vmem>>, vector<16x16xbf16>
      %c0_33 = arith.constant 0 : index
      %c0_34 = arith.constant 0 : index
      %126 = vector.load %arg4[%c0_33, %c0_34] : memref<16x128xbf16, #tpu.memory_space<vmem>>, vector<16x128xbf16>
      %cst_35 = arith.constant dense<0.000000e+00> : vector<16x128xf32>
      %127 = tpu.matmul %125, %126, %cst_35 {dimension_numbers = #tpu.dot_dimension_numbers<[1], [0], [0], [1], [0, 0, 1, 1], [], []>} : vector<16x16xbf16>, vector<16x128xbf16>, vector<16x128xf32> -> vector<16x128xf32>
      %c0_36 = arith.constant 0 : index
      %c0_37 = arith.constant 0 : index
      %128 = vector.load %arg5[%c0_36, %c0_37] : memref<1x128xf32, #tpu.memory_space<vmem>>, vector<1x128xf32>
      %129 = vector.broadcast %128 : vector<1x128xf32> to vector<16x128xf32>
      %130 = arith.subf %127, %129 : vector<16x128xf32>
      %c0_38 = arith.constant 0 : index
      %c0_39 = arith.constant 0 : index
      %131 = vector.load %arg6[%c0_38, %c0_39] : memref<1x128xf32, #tpu.memory_space<vmem>>, vector<1x128xf32>
      %132 = vector.broadcast %131 : vector<1x128xf32> to vector<16x128xf32>
      %133 = arith.mulf %132, %130 : vector<16x128xf32>
      %134 = arith.mulf %133, %130 : vector<16x128xf32>
      %135 = math.exp %134 : vector<16x128xf32>
      %c0_40 = arith.constant 0 : index
      %c0_41 = arith.constant 0 : index
      %136 = vector.load %arg9[%c0_40, %c0_41] : memref<16x128xf32, #tpu.memory_space<vmem>>, vector<16x128xf32>
      tpu.vector_store %arg9[%c0_40, %c0_41], %135 {strides = array<i32>} : memref<16x128xf32, #tpu.memory_space<vmem>>, vector<16x128xf32>,
      %cst_42 = arith.constant 0.000000e+00 : f32
      %137 = vector.broadcast %cst_42 : f32 to vector<16x128xf32>
      %c0_43 = arith.constant 0 : index
      %c0_44 = arith.constant 0 : index
      %138 = vector.load %arg8[%c0_43, %c0_44] : memref<16x128xf32, #tpu.memory_space<vmem>>, vector<16x128xf32>
      tpu.vector_store %arg8[%c0_43, %c0_44], %137 {strides = array<i32>} : memref<16x128xf32, #tpu.memory_space<vmem>>, vector<16x128xf32>,
    } else {
    }
    %c0_i32_1 = arith.constant 0 : i32
    %c1_i32 = arith.constant 1 : i32
    %3 = arith.muli %c0_i32_1, %c1_i32 : i32
    %c0_i32_2 = arith.constant 0 : i32
    %4 = arith.addi %c0_i32_2, %3 : i32
    %c16_i32 = arith.constant 16 : i32
    %5 = arith.muli %4, %c16_i32 : i32
    %6 = tpu.assume_multiple %5, 16 : i32
    %7 = arith.index_cast %6 : i32 to index
    %c0 = arith.constant 0 : index
    %8 = vector.load %arg9[%7, %c0] : memref<16x128xf32, #tpu.memory_space<vmem>>, vector<16x128xf32>
    %9 = arith.index_cast %6 : i32 to index
    %c0_3 = arith.constant 0 : index
    %10 = vector.load %arg8[%9, %c0_3] : memref<16x128xf32, #tpu.memory_space<vmem>>, vector<16x128xf32>
    %c0_i32_4 = arith.constant 0 : i32
    %11 = arith.addf %10, %8 : vector<16x128xf32>
    %cst = arith.constant 9.990000e-01 : f32
    %12 = vector.broadcast %cst : f32 to vector<16x128xf32>
    %13 = arith.cmpf ogt, %11, %12 : vector<16x128xf32>
    %14 = arith.extui %13 : vector<16x128xi1> to vector<16x128xi32>
    %15 = arith.sitofp %14 : vector<16x128xi32> to vector<16x128xf32>
    %16 = arith.truncf %15 : vector<16x128xf32> to vector<16x128xbf16>
    %17 = arith.index_cast %c0_i32_4 : i32 to index
    %18 = arith.index_cast %6 : i32 to index
    %c0_5 = arith.constant 0 : index
    %19 = vector.load %arg7[%17, %18, %c0_5] : memref<8x16x128xbf16, #tpu.memory_space<vmem>>, vector<1x16x128xbf16>
    %20 = vector.shape_cast %19 : vector<1x16x128xbf16> to vector<16x128xbf16>
    %21 = vector.shape_cast %16 : vector<16x128xbf16> to vector<1x16x128xbf16>
    tpu.vector_store %arg7[%17, %18, %c0_5], %21 {strides = array<i32>} : memref<8x16x128xbf16, #tpu.memory_space<vmem>>, vector<1x16x128xbf16>,
    %cst_6 = arith.constant 9.990000e-01 : f32
    %22 = vector.broadcast %cst_6 : f32 to vector<16x128xf32>
    %23 = arith.subf %11, %22 : vector<16x128xf32>
    %24 = arith.select %13, %23, %11 : vector<16x128xi1>, vector<16x128xf32>
    %c1_i32_7 = arith.constant 1 : i32
    %25 = arith.addf %24, %8 : vector<16x128xf32>
    %cst_8 = arith.constant 9.990000e-01 : f32
    %26 = vector.broadcast %cst_8 : f32 to vector<16x128xf32>
    %27 = arith.cmpf ogt, %25, %26 : vector<16x128xf32>
    %28 = arith.extui %27 : vector<16x128xi1> to vector<16x128xi32>
    %29 = arith.sitofp %28 : vector<16x128xi32> to vector<16x128xf32>
    %30 = arith.truncf %29 : vector<16x128xf32> to vector<16x128xbf16>
    %31 = arith.index_cast %c1_i32_7 : i32 to index
    %32 = arith.index_cast %6 : i32 to index
    %c0_9 = arith.constant 0 : index
    %33 = vector.load %arg7[%31, %32, %c0_9] : memref<8x16x128xbf16, #tpu.memory_space<vmem>>, vector<1x16x128xbf16>
    %34 = vector.shape_cast %33 : vector<1x16x128xbf16> to vector<16x128xbf16>
    %35 = vector.shape_cast %30 : vector<16x128xbf16> to vector<1x16x128xbf16>
    tpu.vector_store %arg7[%31, %32, %c0_9], %35 {strides = array<i32>} : memref<8x16x128xbf16, #tpu.memory_space<vmem>>, vector<1x16x128xbf16>,
    %cst_10 = arith.constant 9.990000e-01 : f32
    %36 = vector.broadcast %cst_10 : f32 to vector<16x128xf32>
    %37 = arith.subf %25, %36 : vector<16x128xf32>
    %38 = arith.select %27, %37, %25 : vector<16x128xi1>, vector<16x128xf32>
    %c2_i32 = arith.constant 2 : i32
    %39 = arith.addf %38, %8 : vector<16x128xf32>
    %cst_11 = arith.constant 9.990000e-01 : f32
    %40 = vector.broadcast %cst_11 : f32 to vector<16x128xf32>
    %41 = arith.cmpf ogt, %39, %40 : vector<16x128xf32>
    %42 = arith.extui %41 : vector<16x128xi1> to vector<16x128xi32>
    %43 = arith.sitofp %42 : vector<16x128xi32> to vector<16x128xf32>
    %44 = arith.truncf %43 : vector<16x128xf32> to vector<16x128xbf16>
    %45 = arith.index_cast %c2_i32 : i32 to index
    %46 = arith.index_cast %6 : i32 to index
    %c0_12 = arith.constant 0 : index
    %47 = vector.load %arg7[%45, %46, %c0_12] : memref<8x16x128xbf16, #tpu.memory_space<vmem>>, vector<1x16x128xbf16>
    %48 = vector.shape_cast %47 : vector<1x16x128xbf16> to vector<16x128xbf16>
    %49 = vector.shape_cast %44 : vector<16x128xbf16> to vector<1x16x128xbf16>
    tpu.vector_store %arg7[%45, %46, %c0_12], %49 {strides = array<i32>} : memref<8x16x128xbf16, #tpu.memory_space<vmem>>, vector<1x16x128xbf16>,
    %cst_13 = arith.constant 9.990000e-01 : f32
    %50 = vector.broadcast %cst_13 : f32 to vector<16x128xf32>
    %51 = arith.subf %39, %50 : vector<16x128xf32>
    %52 = arith.select %41, %51, %39 : vector<16x128xi1>, vector<16x128xf32>
    %c3_i32 = arith.constant 3 : i32
    %53 = arith.addf %52, %8 : vector<16x128xf32>
    %cst_14 = arith.constant 9.990000e-01 : f32
    %54 = vector.broadcast %cst_14 : f32 to vector<16x128xf32>
    %55 = arith.cmpf ogt, %53, %54 : vector<16x128xf32>
    %56 = arith.extui %55 : vector<16x128xi1> to vector<16x128xi32>
    %57 = arith.sitofp %56 : vector<16x128xi32> to vector<16x128xf32>
    %58 = arith.truncf %57 : vector<16x128xf32> to vector<16x128xbf16>
    %59 = arith.index_cast %c3_i32 : i32 to index
    %60 = arith.index_cast %6 : i32 to index
    %c0_15 = arith.constant 0 : index
    %61 = vector.load %arg7[%59, %60, %c0_15] : memref<8x16x128xbf16, #tpu.memory_space<vmem>>, vector<1x16x128xbf16>
    %62 = vector.shape_cast %61 : vector<1x16x128xbf16> to vector<16x128xbf16>
    %63 = vector.shape_cast %58 : vector<16x128xbf16> to vector<1x16x128xbf16>
    tpu.vector_store %arg7[%59, %60, %c0_15], %63 {strides = array<i32>} : memref<8x16x128xbf16, #tpu.memory_space<vmem>>, vector<1x16x128xbf16>,
    %cst_16 = arith.constant 9.990000e-01 : f32
    %64 = vector.broadcast %cst_16 : f32 to vector<16x128xf32>
    %65 = arith.subf %53, %64 : vector<16x128xf32>
    %66 = arith.select %55, %65, %53 : vector<16x128xi1>, vector<16x128xf32>
    %c4_i32 = arith.constant 4 : i32
    %67 = arith.addf %66, %8 : vector<16x128xf32>
    %cst_17 = arith.constant 9.990000e-01 : f32
    %68 = vector.broadcast %cst_17 : f32 to vector<16x128xf32>
    %69 = arith.cmpf ogt, %67, %68 : vector<16x128xf32>
    %70 = arith.extui %69 : vector<16x128xi1> to vector<16x128xi32>
    %71 = arith.sitofp %70 : vector<16x128xi32> to vector<16x128xf32>
    %72 = arith.truncf %71 : vector<16x128xf32> to vector<16x128xbf16>
    %73 = arith.index_cast %c4_i32 : i32 to index
    %74 = arith.index_cast %6 : i32 to index
    %c0_18 = arith.constant 0 : index
    %75 = vector.load %arg7[%73, %74, %c0_18] : memref<8x16x128xbf16, #tpu.memory_space<vmem>>, vector<1x16x128xbf16>
    %76 = vector.shape_cast %75 : vector<1x16x128xbf16> to vector<16x128xbf16>
    %77 = vector.shape_cast %72 : vector<16x128xbf16> to vector<1x16x128xbf16>
    tpu.vector_store %arg7[%73, %74, %c0_18], %77 {strides = array<i32>} : memref<8x16x128xbf16, #tpu.memory_space<vmem>>, vector<1x16x128xbf16>,
    %cst_19 = arith.constant 9.990000e-01 : f32
    %78 = vector.broadcast %cst_19 : f32 to vector<16x128xf32>
    %79 = arith.subf %67, %78 : vector<16x128xf32>
    %80 = arith.select %69, %79, %67 : vector<16x128xi1>, vector<16x128xf32>
    %c5_i32 = arith.constant 5 : i32
    %81 = arith.addf %80, %8 : vector<16x128xf32>
    %cst_20 = arith.constant 9.990000e-01 : f32
    %82 = vector.broadcast %cst_20 : f32 to vector<16x128xf32>
    %83 = arith.cmpf ogt, %81, %82 : vector<16x128xf32>
    %84 = arith.extui %83 : vector<16x128xi1> to vector<16x128xi32>
    %85 = arith.sitofp %84 : vector<16x128xi32> to vector<16x128xf32>
    %86 = arith.truncf %85 : vector<16x128xf32> to vector<16x128xbf16>
    %87 = arith.index_cast %c5_i32 : i32 to index
    %88 = arith.index_cast %6 : i32 to index
    %c0_21 = arith.constant 0 : index
    %89 = vector.load %arg7[%87, %88, %c0_21] : memref<8x16x128xbf16, #tpu.memory_space<vmem>>, vector<1x16x128xbf16>
    %90 = vector.shape_cast %89 : vector<1x16x128xbf16> to vector<16x128xbf16>
    %91 = vector.shape_cast %86 : vector<16x128xbf16> to vector<1x16x128xbf16>
    tpu.vector_store %arg7[%87, %88, %c0_21], %91 {strides = array<i32>} : memref<8x16x128xbf16, #tpu.memory_space<vmem>>, vector<1x16x128xbf16>,
    %cst_22 = arith.constant 9.990000e-01 : f32
    %92 = vector.broadcast %cst_22 : f32 to vector<16x128xf32>
    %93 = arith.subf %81, %92 : vector<16x128xf32>
    %94 = arith.select %83, %93, %81 : vector<16x128xi1>, vector<16x128xf32>
    %c6_i32 = arith.constant 6 : i32
    %95 = arith.addf %94, %8 : vector<16x128xf32>
    %cst_23 = arith.constant 9.990000e-01 : f32
    %96 = vector.broadcast %cst_23 : f32 to vector<16x128xf32>
    %97 = arith.cmpf ogt, %95, %96 : vector<16x128xf32>
    %98 = arith.extui %97 : vector<16x128xi1> to vector<16x128xi32>
    %99 = arith.sitofp %98 : vector<16x128xi32> to vector<16x128xf32>
    %100 = arith.truncf %99 : vector<16x128xf32> to vector<16x128xbf16>
    %101 = arith.index_cast %c6_i32 : i32 to index
    %102 = arith.index_cast %6 : i32 to index
    %c0_24 = arith.constant 0 : index
    %103 = vector.load %arg7[%101, %102, %c0_24] : memref<8x16x128xbf16, #tpu.memory_space<vmem>>, vector<1x16x128xbf16>
    %104 = vector.shape_cast %103 : vector<1x16x128xbf16> to vector<16x128xbf16>
    %105 = vector.shape_cast %100 : vector<16x128xbf16> to vector<1x16x128xbf16>
    tpu.vector_store %arg7[%101, %102, %c0_24], %105 {strides = array<i32>} : memref<8x16x128xbf16, #tpu.memory_space<vmem>>, vector<1x16x128xbf16>,
    %cst_25 = arith.constant 9.990000e-01 : f32
    %106 = vector.broadcast %cst_25 : f32 to vector<16x128xf32>
    %107 = arith.subf %95, %106 : vector<16x128xf32>
    %108 = arith.select %97, %107, %95 : vector<16x128xi1>, vector<16x128xf32>
    %c7_i32 = arith.constant 7 : i32
    %109 = arith.addf %108, %8 : vector<16x128xf32>
    %cst_26 = arith.constant 9.990000e-01 : f32
    %110 = vector.broadcast %cst_26 : f32 to vector<16x128xf32>
    %111 = arith.cmpf ogt, %109, %110 : vector<16x128xf32>
    %112 = arith.extui %111 : vector<16x128xi1> to vector<16x128xi32>
    %113 = arith.sitofp %112 : vector<16x128xi32> to vector<16x128xf32>
    %114 = arith.truncf %113 : vector<16x128xf32> to vector<16x128xbf16>
    %115 = arith.index_cast %c7_i32 : i32 to index
    %116 = arith.index_cast %6 : i32 to index
    %c0_27 = arith.constant 0 : index
    %117 = vector.load %arg7[%115, %116, %c0_27] : memref<8x16x128xbf16, #tpu.memory_space<vmem>>, vector<1x16x128xbf16>
    %118 = vector.shape_cast %117 : vector<1x16x128xbf16> to vector<16x128xbf16>
    %119 = vector.shape_cast %114 : vector<16x128xbf16> to vector<1x16x128xbf16>
    tpu.vector_store %arg7[%115, %116, %c0_27], %119 {strides = array<i32>} : memref<8x16x128xbf16, #tpu.memory_space<vmem>>, vector<1x16x128xbf16>,
    %cst_28 = arith.constant 9.990000e-01 : f32
    %120 = vector.broadcast %cst_28 : f32 to vector<16x128xf32>
    %121 = arith.subf %109, %120 : vector<16x128xf32>
    %122 = arith.select %111, %121, %109 : vector<16x128xi1>, vector<16x128xf32>
    %c8_i32 = arith.constant 8 : i32
    %123 = arith.index_cast %6 : i32 to index
    %c0_29 = arith.constant 0 : index
    %124 = vector.load %arg8[%123, %c0_29] : memref<16x128xf32, #tpu.memory_space<vmem>>, vector<16x128xf32>
    tpu.vector_store %arg8[%123, %c0_29], %122 {strides = array<i32>} : memref<16x128xf32, #tpu.memory_space<vmem>>, vector<16x128xf32>,
    %c1_i32_30 = arith.constant 1 : i32
    return
  }
  func.func @transform_0(%arg0: i32, %arg1: i32, %arg2: i32) -> (i32, i32) {
    %c0_i32 = arith.constant 0 : i32
    %c0_i32_0 = arith.constant 0 : i32
    return %arg0, %c0_i32 : i32, i32
  }
  func.func @transform_1(%arg0: i32, %arg1: i32, %arg2: i32) -> (i32, i32) {
    %c0_i32 = arith.constant 0 : i32
    %c0_i32_0 = arith.constant 0 : i32
    return %c0_i32, %arg1 : i32, i32
  }
  func.func @transform_2(%arg0: i32, %arg1: i32, %arg2: i32) -> (i32, i32) {
    %c0_i32 = arith.constant 0 : i32
    %c0_i32_0 = arith.constant 0 : i32
    return %c0_i32, %arg1 : i32, i32
  }
  func.func @transform_3(%arg0: i32, %arg1: i32, %arg2: i32) -> (i32, i32) {
    %c0_i32 = arith.constant 0 : i32
    %c0_i32_0 = arith.constant 0 : i32
    return %c0_i32, %arg1 : i32, i32
  }
  func.func @transform_4(%arg0: i32, %arg1: i32, %arg2: i32) -> (i32, i32, i32) {
    %c0_i32 = arith.constant 0 : i32
    return %arg2, %arg0, %arg1 : i32, i32, i32
  }
}

</mosaic_0001>

<llo_original>
// kernel: tpu_custom_call.1
$region0: #{tpu_custom_call.1}
  #allocation0 [shape = 'u32[]', space=smem, size = 0x4, offset = 0x4, fixed_abs, tag = 'smem constant byte address 0x4 - core index']
  #allocation1 [shape = 'u32[144,128]{1,0:T(1,128)}', space=vmem, size = 0x12000, scoped, tag = 'internal scratch']
  #allocation2 [shape = 'f32[16,128]{1,0:T(8,128)}', space=vmem, size = 0x2000, scoped, tag = 'scratch operand']
  #allocation3 [shape = 'f32[16,128]{1,0:T(8,128)}', space=vmem, size = 0x2000, scoped, tag = 'scratch operand']
  #allocation10 [shape = 's32[]', space=sflag, size = 0x4, offset = 0, fixed_abs, tag = 'sflag constant byte address 0x0 - dummy sync flag']
  %s0 = inlined_call_operand.hbm [shape: bf16[16,16], index: 0, kind: input, shape index: {}]
  %s1 = inlined_call_operand.hbm [shape: bf16[16,128], index: 1, kind: input, shape index: {}]
  %s2 = inlined_call_operand.vmem [shape: f32[1,128], index: 2, kind: input, shape index: {}]
  %s3 = inlined_call_operand.vmem [shape: f32[1,128], index: 3, kind: input, shape index: {}]
  %s4 = inlined_call_operand.hbm [shape: bf16[8,2,32], index: 4, kind: output, shape index: {}]
  %s5 = sld [smem:[#allocation0]]
  $region38: #{tpu_custom_call.1} parent=0
    _
  %s7 = ssub.s32 1, %s5
  %s8 = scalar_select 0, %s7, %s5
  $region1: #{tpu_custom_call.1} parent=0
    #allocation4 [shape = 'u8[4096]{0}', space=vmem, size = 0x1000, scoped, tag = 'input window, operand 0, single buffered']
    #allocation5 [shape = 's32[1]{0}', space=sflag, size = 0x4, scoped, tag = 'scoped memory for tpu_custom_call.1']
    #allocation6 [shape = 's32[1]{0}', space=sflag, size = 0x4, scoped, tag = 'scoped memory for tpu_custom_call.1']
    #allocation7 [shape = 'u8[4096]{0}', space=vmem, size = 0x1000, scoped, tag = 'input window, operand 1, single buffered']
    #allocation8 [shape = 's32[1]{0}', space=sflag, size = 0x4, scoped, tag = 'scoped memory for tpu_custom_call.1']
    #allocation9 [shape = 'u8[32768]{0}', space=vmem, size = 0x8000, scoped, tag = 'output window, operand 0, single buffered']
    %9 = vsyncpa [#allocation5], 0
    %10 = vsyncpa [#allocation8], 0
    %11 = vsyncpa [#allocation6], 0
    // Predicated region
    $region2: #{tpu_custom_call.1} parent=1 // pred_check
      _
    $region3: #{tpu_custom_call.1} parent=1 // pred_check_branch
      %13 = sbr.rel (0) target = $region5
    $region4: #{tpu_custom_call.1} parent=1 // pred_region
      %s15 = ssub.s32 128, 128
      %16 = vsyncadd [#allocation5], %s15
      %s17 = sshll.u32 [#allocation4], 4
      %s18 = int_to_ptr.vmem [resolvable:$true] %s17
      %23 = dma.hbm_to_vmem [thread:$0]  %s0, 128, %s18, [#allocation5], 64, 64, 4
    $region5: #{tpu_custom_call.1} parent=1 // pred_fallthru
      _
    // Predicated region
    $region6: #{tpu_custom_call.1} parent=1 // pred_check
      _
    $region7: #{tpu_custom_call.1} parent=1 // pred_check_branch
      %25 = sbr.rel (0) target = $region9
    $region8: #{tpu_custom_call.1} parent=1 // pred_region
      %s27 = ssub.s32 128, 128
      %28 = vsyncadd [#allocation8], %s27
      %s29 = sshll.u32 [#allocation7], 4
      %s30 = int_to_ptr.vmem [resolvable:$true] %s29
      %35 = dma.hbm_to_vmem [thread:$0]  %s1, 128, %s30, [#allocation8], 64, 64, 4
    $region9: #{tpu_custom_call.1} parent=1 // pred_fallthru
      _
    // Predicated region
    $region10: #{tpu_custom_call.1} parent=1 // pred_check
      _
    $region11: #{tpu_custom_call.1} parent=1 // pred_check_branch
      %37 = sbr.rel (0) target = $region13
    $region12: #{tpu_custom_call.1} parent=1 // pred_region
      _
    $region13: #{tpu_custom_call.1} parent=1 // pred_fallthru
      _
    // Predicated region
    $region14: #{tpu_custom_call.1} parent=1 // pred_check
      _
    $region15: #{tpu_custom_call.1} parent=1 // pred_check_branch
      %39 = sbr.rel (0) target = $region17
    $region16: #{tpu_custom_call.1} parent=1 // pred_region
      _
    $region17: #{tpu_custom_call.1} parent=1 // pred_fallthru
      _
    // Predicated region
    $region18: #{tpu_custom_call.1} parent=1 // pred_check
      _
    $region19: #{tpu_custom_call.1} parent=1 // pred_check_branch
      %41 = sbr.rel (0) target = $region21
    $region20: #{tpu_custom_call.1} parent=1 // pred_region
      %42 = dma.done [#allocation5], 128
    $region21: #{tpu_custom_call.1} parent=1 // pred_fallthru
      _
    // Predicated region
    $region22: #{tpu_custom_call.1} parent=1 // pred_check
      _
    $region23: #{tpu_custom_call.1} parent=1 // pred_check_branch
      %44 = sbr.rel (0) target = $region25
    $region24: #{tpu_custom_call.1} parent=1 // pred_region
      %45 = dma.done [#allocation8], 128
    $region25: #{tpu_custom_call.1} parent=1 // pred_fallthru
      _
    %p47 = scmp.eq.s32.totalorder 0, 0
    // Predicated region
    $region26: #{tpu_custom_call.1} parent=1 // pred_check
      %p48 = pneg %p47
    $region27: #{tpu_custom_call.1} parent=1 // pred_check_branch
      %50 = sbr.rel (%p48) target = $region29
    $region28: #{tpu_custom_call.1} parent=1 // pred_region
      %v51 = vld [vmem:[#allocation4] sm:$0xf]
      %v52 = vld [vmem:[#allocation4 + $0x4] sm:$0xf]
      %v53 = vld [vmem:[#allocation7] sm:$0xf]
      %v54 = vld [vmem:[#allocation7 + $0x4] sm:$0xf]
      %v57 = vunpack.c.l.b16 %v51
      %v58 = vunpack.c.l.b16 %v52
      %v59 = vpack.c.b16 %v58, %v57
      %v62 = vunpack.c.l.b16 %v53
      %v63 = vunpack.c.l.b16 %v54
      %v64 = vpack.c.b16 %v63, %v62
      %vm66 = vcmask 130048
      %v68 = vsel %vm66, %v59, 0
      %70 = vmatprep.subr.bf16.mxu0 0
      %71 = vmatpush1.bf16.msra.mxu0 %v64
      %72 = vmatprep.subr.bf16.mxu0 0
      %73 = vmatpush1.bf16.msra.mxu0 0
      %74 = vmatprep.subr.bf16.mxu0 0
      %75 = vmatpush1.bf16.msra.mxu0 0
      %76 = vmatprep.subr.bf16.mxu0 0
      %77 = vmatpush1.bf16.msra.mxu0 0
      %78 = vmatprep.subr.bf16.mxu0 0
      %79 = vmatpush1.bf16.msra.mxu0 0
      %80 = vmatprep.subr.bf16.mxu0 0
      %81 = vmatpush1.bf16.msra.mxu0 0
      %82 = vmatprep.subr.bf16.mxu0 0
      %83 = vmatpush1.bf16.msra.mxu0 0
      %84 = vmatprep.subr.bf16.mxu0 0
      %85 = vmatpush1.bf16.msra.mxu0 0
      %86 = vmatprep.subr.bf16.mxu0 0
      %87 = vmatpush1.bf16.msra.mxu0 0
      %88 = vmatprep.subr.bf16.mxu0 0
      %89 = vmatpush1.bf16.msra.mxu0 0
      %90 = vmatprep.subr.bf16.mxu0 0
      %91 = vmatpush1.bf16.msra.mxu0 0
      %92 = vmatprep.subr.bf16.mxu0 0
      %93 = vmatpush1.bf16.msra.mxu0 0
      %94 = vmatprep.subr.bf16.mxu0 0
      %95 = vmatpush1.bf16.msra.mxu0 0
      %96 = vmatprep.subr.bf16.mxu0 0
      %97 = vmatpush1.bf16.msra.mxu0 0
      %98 = vmatprep.subr.bf16.mxu0 0
      %99 = vmatpush1.bf16.msra.mxu0 0
      %100 = vmatprep.subr.bf16.mxu0 0
      %101 = vmatpush1.bf16.msra.mxu0 0
      %102 = vmatprep.mubr.bf16.mxu0 0
      %103 = vmatmul.mubr.bf16.gmra.mrb[0].mxu0 %v68
      %v104 = vpop.f32.mrb[0].mxu0
      %v105 = vadd.f32 0.0, %v104
      %v106 = vpop.f32.mrb[0].mxu0
      %v107 = vpop.f32.mrb[0].mxu0
      %v108 = vadd.f32 0.0, %v107
      %v109 = vpop.f32.mrb[0].mxu0
      %110 = vdwg.mxu0
      %v111 = vld [vmem:[%s2] sm:$0x1]
      %v113 = vlaneseq
      %v114 = vshrl.u32 %v113, 7
      %v115 = vsub.s32 0, %v114
      %v116 = vrot.slane %v111, %v115
      %v118 = vsub.f32 %v105, %v116
      %v119 = vsub.f32 %v108, %v116
      %v120 = vld [vmem:[%s3] sm:$0x1]
      %v122 = vlaneseq
      %v123 = vshrl.u32 %v122, 7
      %v124 = vsub.s32 0, %v123
      %v125 = vrot.slane %v120, %v124
      %v127 = vmul.f32 %v125, %v118
      %v128 = vmul.f32 %v125, %v119
      %v129 = vmul.f32 %v127, %v118
      %v130 = vmul.f32 %v128, %v119
      %v131 = vmul.f32 %v129, 1.442695
      %v132 = vpow.pop %v131
      %v133 = vmul.f32 %v130, 1.442695
      %v134 = vpow.pop %v133
      %135 = vst [vmem:[#allocation3] sm:$0xff] %v132
      %136 = vst [vmem:[#allocation3 + $0x8] sm:$0xff] %v134
      %137 = vst [vmem:[#allocation2] sm:$0xff] 0.0
      %138 = vst [vmem:[#allocation2 + $0x8] sm:$0xff] 0.0
    $region29: #{tpu_custom_call.1} parent=1 // pred_fallthru
      _
    %v139 = vld [vmem:[#allocation3] sm:$0xff]
    %v140 = vld [vmem:[#allocation3 + $0x8] sm:$0xff]
    %v141 = vld [vmem:[#allocation2] sm:$0xff]
    %v142 = vld [vmem:[#allocation2 + $0x8] sm:$0xff]
    %v143 = vadd.f32 %v141, %v139
    %v144 = vadd.f32 %v142, %v140
    %vm145 = vcmp.gt.f32.partialorder %v143, 0.999
    %vm146 = vcmp.gt.f32.partialorder %v144, 0.999
    %v147 = vsel %vm145, 1, 0
    %v148 = vsel %vm146, 1, 0
    %v149 = vcvt.s32.f32 %v147
    %v150 = vcvt.s32.f32 %v148
    %v151 = vpack.c.bf16 %v150, %v149
    %v153 = vcombine.high %v151, %v151
    %v155 = vunpack.c.l.s4 1966171168
    %v156 = vunpack.c.0.s8 %v155
    %v157 = vlaneseq
    %v158 = vshrl.u32 %v157, 7
    %v159 = vsub.s32 %v156, %v158
    %v160 = vrot.slane %v151, %v159
    %v162 = vunpack.c.l.s4 1966171168
    %v163 = vunpack.c.0.s8 %v162
    %v164 = vlaneseq
    %v165 = vshrl.u32 %v164, 7
    %v166 = vsub.s32 %v163, %v165
    %v167 = vrot.slane %v153, %v166
    %v168 = vcombine.high %v160, %v160
    %v169 = vcombine.high %v167, %v167
    %v171 = vunpack.c.l.s4 1966171168
    %v172 = vunpack.c.0.s8 %v171
    %v173 = vlaneseq
    %v174 = vshrl.u32 %v173, 7
    %v175 = vsub.s32 %v172, %v174
    %v176 = vrot.slane %v160, %v175
    %v178 = vunpack.c.l.s4 1966171168
    %v179 = vunpack.c.0.s8 %v178
    %v180 = vlaneseq
    %v181 = vshrl.u32 %v180, 7
    %v182 = vsub.s32 %v179, %v181
    %v183 = vrot.slane %v167, %v182
    %v185 = vunpack.c.l.s4 1966171168
    %v186 = vunpack.c.0.s8 %v185
    %v187 = vlaneseq
    %v188 = vshrl.u32 %v187, 7
    %v189 = vsub.s32 %v186, %v188
    %v190 = vrot.slane %v168, %v189
    %v192 = vunpack.c.l.s4 1966171168
    %v193 = vunpack.c.0.s8 %v192
    %v194 = vlaneseq
    %v195 = vshrl.u32 %v194, 7
    %v196 = vsub.s32 %v193, %v195
    %v197 = vrot.slane %v169, %v196
    %v198 = vcombine.high %v176, %v176
    %v199 = vcombine.high %v183, %v183
    %v200 = vcombine.high %v190, %v190
    %v201 = vcombine.high %v197, %v197
    %210 = vst [vmem:[#allocation9] sm:$0x1] %v176
    %211 = vst [vmem:[#allocation9 + $0x1] sm:$0x1] %v190
    %212 = vst [vmem:[#allocation9 + $0x2] sm:$0x1] %v198
    %213 = vst [vmem:[#allocation9 + $0x3] sm:$0x1] %v200
    %214 = vst [vmem:[#allocation9 + $0x4] sm:$0x1] %v183
    %215 = vst [vmem:[#allocation9 + $0x5] sm:$0x1] %v197
    %216 = vst [vmem:[#allocation9 + $0x6] sm:$0x1] %v199
    %217 = vst [vmem:[#allocation9 + $0x7] sm:$0x1] %v201
    %v218 = vsub.f32 %v143, 0.999
    %v219 = vsub.f32 %v144, 0.999
    %v220 = vsel %vm145, %v218, %v143
    %v221 = vsel %vm146, %v219, %v144
    %v222 = vadd.f32 %v220, %v139
    %v223 = vadd.f32 %v221, %v140
    %vm224 = vcmp.gt.f32.partialorder %v222, 0.999
    %vm225 = vcmp.gt.f32.partialorder %v223, 0.999
    %v226 = vsel %vm224, 1, 0
    %v227 = vsel %vm225, 1, 0
    %v228 = vcvt.s32.f32 %v226
    %v229 = vcvt.s32.f32 %v227
    %v230 = vpack.c.bf16 %v229, %v228
    %v232 = vcombine.high %v230, %v230
    %v234 = vunpack.c.l.s4 1966171168
    %v235 = vunpack.c.0.s8 %v234
    %v236 = vlaneseq
    %v237 = vshrl.u32 %v236, 7
    %v238 = vsub.s32 %v235, %v237
    %v239 = vrot.slane %v230, %v238
    %v241 = vunpack.c.l.s4 1966171168
    %v242 = vunpack.c.0.s8 %v241
    %v243 = vlaneseq
    %v244 = vshrl.u32 %v243, 7
    %v245 = vsub.s32 %v242, %v244
    %v246 = vrot.slane %v232, %v245
    %v247 = vcombine.high %v239, %v239
    %v248 = vcombine.high %v246, %v246
    %v250 = vunpack.c.l.s4 1966171168
    %v251 = vunpack.c.0.s8 %v250
    %v252 = vlaneseq
    %v253 = vshrl.u32 %v252, 7
    %v254 = vsub.s32 %v251, %v253
    %v255 = vrot.slane %v239, %v254
    %v257 = vunpack.c.l.s4 1966171168
    %v258 = vunpack.c.0.s8 %v257
    %v259 = vlaneseq
    %v260 = vshrl.u32 %v259, 7
    %v261 = vsub.s32 %v258, %v260
    %v262 = vrot.slane %v246, %v261
    %v264 = vunpack.c.l.s4 1966171168
    %v265 = vunpack.c.0.s8 %v264
    %v266 = vlaneseq
    %v267 = vshrl.u32 %v266, 7
    %v268 = vsub.s32 %v265, %v267
    %v269 = vrot.slane %v247, %v268
    %v271 = vunpack.c.l.s4 1966171168
    %v272 = vunpack.c.0.s8 %v271
    %v273 = vlaneseq
    %v274 = vshrl.u32 %v273, 7
    %v275 = vsub.s32 %v272, %v274
    %v276 = vrot.slane %v248, %v275
    %v277 = vcombine.high %v255, %v255
    %v278 = vcombine.high %v262, %v262
    %v279 = vcombine.high %v269, %v269
    %v280 = vcombine.high %v276, %v276
    %s289 = sadd.s32 0, 8
    %s290 = scalar_lea.vmem [#allocation9], %s289
    %291 = vst [vmem:[%s290] sm:$0x1] %v255
    %292 = vst [vmem:[%s290 + $0x1] sm:$0x1] %v269
    %293 = vst [vmem:[%s290 + $0x2] sm:$0x1] %v277
    %294 = vst [vmem:[%s290 + $0x3] sm:$0x1] %v279
    %295 = vst [vmem:[%s290 + $0x4] sm:$0x1] %v262
    %296 = vst [vmem:[%s290 + $0x5] sm:$0x1] %v276
    %297 = vst [vmem:[%s290 + $0x6] sm:$0x1] %v278
    %298 = vst [vmem:[%s290 + $0x7] sm:$0x1] %v280
    %v299 = vsub.f32 %v222, 0.999
    %v300 = vsub.f32 %v223, 0.999
    %v301 = vsel %vm224, %v299, %v222
    %v302 = vsel %vm225, %v300, %v223
    %v303 = vadd.f32 %v301, %v139
    %v304 = vadd.f32 %v302, %v140
    %vm305 = vcmp.gt.f32.partialorder %v303, 0.999
    %vm306 = vcmp.gt.f32.partialorder %v304, 0.999
    %v307 = vsel %vm305, 1, 0
    %v308 = vsel %vm306, 1, 0
    %v309 = vcvt.s32.f32 %v307
    %v310 = vcvt.s32.f32 %v308
    %v311 = vpack.c.bf16 %v310, %v309
    %v313 = vcombine.high %v311, %v311
    %v315 = vunpack.c.l.s4 1966171168
    %v316 = vunpack.c.0.s8 %v315
    %v317 = vlaneseq
    %v318 = vshrl.u32 %v317, 7
    %v319 = vsub.s32 %v316, %v318
    %v320 = vrot.slane %v311, %v319
    %v322 = vunpack.c.l.s4 1966171168
    %v323 = vunpack.c.0.s8 %v322
    %v324 = vlaneseq
    %v325 = vshrl.u32 %v324, 7
    %v326 = vsub.s32 %v323, %v325
    %v327 = vrot.slane %v313, %v326
    %v328 = vcombine.high %v320, %v320
    %v329 = vcombine.high %v327, %v327
    %v331 = vunpack.c.l.s4 1966171168
    %v332 = vunpack.c.0.s8 %v331
    %v333 = vlaneseq
    %v334 = vshrl.u32 %v333, 7
    %v335 = vsub.s32 %v332, %v334
    %v336 = vrot.slane %v320, %v335
    %v338 = vunpack.c.l.s4 1966171168
    %v339 = vunpack.c.0.s8 %v338
    %v340 = vlaneseq
    %v341 = vshrl.u32 %v340, 7
    %v342 = vsub.s32 %v339, %v341
    %v343 = vrot.slane %v327, %v342
    %v345 = vunpack.c.l.s4 1966171168
    %v346 = vunpack.c.0.s8 %v345
    %v347 = vlaneseq
    %v348 = vshrl.u32 %v347, 7
    %v349 = vsub.s32 %v346, %v348
    %v350 = vrot.slane %v328, %v349
    %v352 = vunpack.c.l.s4 1966171168
    %v353 = vunpack.c.0.s8 %v352
    %v354 = vlaneseq
    %v355 = vshrl.u32 %v354, 7
    %v356 = vsub.s32 %v353, %v355
    %v357 = vrot.slane %v329, %v356
    %v358 = vcombine.high %v336, %v336
    %v359 = vcombine.high %v343, %v343
    %v360 = vcombine.high %v350, %v350
    %v361 = vcombine.high %v357, %v357
    %s370 = sadd.s32 0, 16
    %s371 = scalar_lea.vmem [#allocation9], %s370
    %372 = vst [vmem:[%s371] sm:$0x1] %v336
    %373 = vst [vmem:[%s371 + $0x1] sm:$0x1] %v350
    %374 = vst [vmem:[%s371 + $0x2] sm:$0x1] %v358
    %375 = vst [vmem:[%s371 + $0x3] sm:$0x1] %v360
    %376 = vst [vmem:[%s371 + $0x4] sm:$0x1] %v343
    %377 = vst [vmem:[%s371 + $0x5] sm:$0x1] %v357
    %378 = vst [vmem:[%s371 + $0x6] sm:$0x1] %v359
    %379 = vst [vmem:[%s371 + $0x7] sm:$0x1] %v361
    %v380 = vsub.f32 %v303, 0.999
    %v381 = vsub.f32 %v304, 0.999
    %v382 = vsel %vm305, %v380, %v303
    %v383 = vsel %vm306, %v381, %v304
    %v384 = vadd.f32 %v382, %v139
    %v385 = vadd.f32 %v383, %v140
    %vm386 = vcmp.gt.f32.partialorder %v384, 0.999
    %vm387 = vcmp.gt.f32.partialorder %v385, 0.999
    %v388 = vsel %vm386, 1, 0
    %v389 = vsel %vm387, 1, 0
    %v390 = vcvt.s32.f32 %v388
    %v391 = vcvt.s32.f32 %v389
    %v392 = vpack.c.bf16 %v391, %v390
    %v394 = vcombine.high %v392, %v392
    %v396 = vunpack.c.l.s4 1966171168
    %v397 = vunpack.c.0.s8 %v396
    %v398 = vlaneseq
    %v399 = vshrl.u32 %v398, 7
    %v400 = vsub.s32 %v397, %v399
    %v401 = vrot.slane %v392, %v400
    %v403 = vunpack.c.l.s4 1966171168
    %v404 = vunpack.c.0.s8 %v403
    %v405 = vlaneseq
    %v406 = vshrl.u32 %v405, 7
    %v407 = vsub.s32 %v404, %v406
    %v408 = vrot.slane %v394, %v407
    %v409 = vcombine.high %v401, %v401
    %v410 = vcombine.high %v408, %v408
    %v412 = vunpack.c.l.s4 1966171168
    %v413 = vunpack.c.0.s8 %v412
    %v414 = vlaneseq
    %v415 = vshrl.u32 %v414, 7
    %v416 = vsub.s32 %v413, %v415
    %v417 = vrot.slane %v401, %v416
    %v419 = vunpack.c.l.s4 1966171168
    %v420 = vunpack.c.0.s8 %v419
    %v421 = vlaneseq
    %v422 = vshrl.u32 %v421, 7
    %v423 = vsub.s32 %v420, %v422
    %v424 = vrot.slane %v408, %v423
    %v426 = vunpack.c.l.s4 1966171168
    %v427 = vunpack.c.0.s8 %v426
    %v428 = vlaneseq
    %v429 = vshrl.u32 %v428, 7
    %v430 = vsub.s32 %v427, %v429
    %v431 = vrot.slane %v409, %v430
    %v433 = vunpack.c.l.s4 1966171168
    %v434 = vunpack.c.0.s8 %v433
    %v435 = vlaneseq
    %v436 = vshrl.u32 %v435, 7
    %v437 = vsub.s32 %v434, %v436
    %v438 = vrot.slane %v410, %v437
    %v439 = vcombine.high %v417, %v417
    %v440 = vcombine.high %v424, %v424
    %v441 = vcombine.high %v431, %v431
    %v442 = vcombine.high %v438, %v438
    %s451 = sadd.s32 0, 24
    %s452 = scalar_lea.vmem [#allocation9], %s451
    %453 = vst [vmem:[%s452] sm:$0x1] %v417
    %454 = vst [vmem:[%s452 + $0x1] sm:$0x1] %v431
    %455 = vst [vmem:[%s452 + $0x2] sm:$0x1] %v439
    %456 = vst [vmem:[%s452 + $0x3] sm:$0x1] %v441
    %457 = vst [vmem:[%s452 + $0x4] sm:$0x1] %v424
    %458 = vst [vmem:[%s452 + $0x5] sm:$0x1] %v438
    %459 = vst [vmem:[%s452 + $0x6] sm:$0x1] %v440
    %460 = vst [vmem:[%s452 + $0x7] sm:$0x1] %v442
    %v461 = vsub.f32 %v384, 0.999
    %v462 = vsub.f32 %v385, 0.999
    %v463 = vsel %vm386, %v461, %v384
    %v464 = vsel %vm387, %v462, %v385
    %v465 = vadd.f32 %v463, %v139
    %v466 = vadd.f32 %v464, %v140
    %vm467 = vcmp.gt.f32.partialorder %v465, 0.999
    %vm468 = vcmp.gt.f32.partialorder %v466, 0.999
    %v469 = vsel %vm467, 1, 0
    %v470 = vsel %vm468, 1, 0
    %v471 = vcvt.s32.f32 %v469
    %v472 = vcvt.s32.f32 %v470
    %v473 = vpack.c.bf16 %v472, %v471
    %v475 = vcombine.high %v473, %v473
    %v477 = vunpack.c.l.s4 1966171168
    %v478 = vunpack.c.0.s8 %v477
    %v479 = vlaneseq
    %v480 = vshrl.u32 %v479, 7
    %v481 = vsub.s32 %v478, %v480
    %v482 = vrot.slane %v473, %v481
    %v484 = vunpack.c.l.s4 1966171168
    %v485 = vunpack.c.0.s8 %v484
    %v486 = vlaneseq
    %v487 = vshrl.u32 %v486, 7
    %v488 = vsub.s32 %v485, %v487
    %v489 = vrot.slane %v475, %v488
    %v490 = vcombine.high %v482, %v482
    %v491 = vcombine.high %v489, %v489
    %v493 = vunpack.c.l.s4 1966171168
    %v494 = vunpack.c.0.s8 %v493
    %v495 = vlaneseq
    %v496 = vshrl.u32 %v495, 7
    %v497 = vsub.s32 %v494, %v496
    %v498 = vrot.slane %v482, %v497
    %v500 = vunpack.c.l.s4 1966171168
    %v501 = vunpack.c.0.s8 %v500
    %v502 = vlaneseq
    %v503 = vshrl.u32 %v502, 7
    %v504 = vsub.s32 %v501, %v503
    %v505 = vrot.slane %v489, %v504
    %v507 = vunpack.c.l.s4 1966171168
    %v508 = vunpack.c.0.s8 %v507
    %v509 = vlaneseq
    %v510 = vshrl.u32 %v509, 7
    %v511 = vsub.s32 %v508, %v510
    %v512 = vrot.slane %v490, %v511
    %v514 = vunpack.c.l.s4 1966171168
    %v515 = vunpack.c.0.s8 %v514
    %v516 = vlaneseq
    %v517 = vshrl.u32 %v516, 7
    %v518 = vsub.s32 %v515, %v517
    %v519 = vrot.slane %v491, %v518
    %v520 = vcombine.high %v498, %v498
    %v521 = vcombine.high %v505, %v505
    %v522 = vcombine.high %v512, %v512
    %v523 = vcombine.high %v519, %v519
    %s532 = sadd.s32 0, 32
    %s533 = scalar_lea.vmem [#allocation9], %s532
    %534 = vst [vmem:[%s533] sm:$0x1] %v498
    %535 = vst [vmem:[%s533 + $0x1] sm:$0x1] %v512
    %536 = vst [vmem:[%s533 + $0x2] sm:$0x1] %v520
    %537 = vst [vmem:[%s533 + $0x3] sm:$0x1] %v522
    %538 = vst [vmem:[%s533 + $0x4] sm:$0x1] %v505
    %539 = vst [vmem:[%s533 + $0x5] sm:$0x1] %v519
    %540 = vst [vmem:[%s533 + $0x6] sm:$0x1] %v521
    %541 = vst [vmem:[%s533 + $0x7] sm:$0x1] %v523
    %v542 = vsub.f32 %v465, 0.999
    %v543 = vsub.f32 %v466, 0.999
    %v544 = vsel %vm467, %v542, %v465
    %v545 = vsel %vm468, %v543, %v466
    %v546 = vadd.f32 %v544, %v139
    %v547 = vadd.f32 %v545, %v140
    %vm548 = vcmp.gt.f32.partialorder %v546, 0.999
    %vm549 = vcmp.gt.f32.partialorder %v547, 0.999
    %v550 = vsel %vm548, 1, 0
    %v551 = vsel %vm549, 1, 0
    %v552 = vcvt.s32.f32 %v550
    %v553 = vcvt.s32.f32 %v551
    %v554 = vpack.c.bf16 %v553, %v552
    %v556 = vcombine.high %v554, %v554
    %v558 = vunpack.c.l.s4 1966171168
    %v559 = vunpack.c.0.s8 %v558
    %v560 = vlaneseq
    %v561 = vshrl.u32 %v560, 7
    %v562 = vsub.s32 %v559, %v561
    %v563 = vrot.slane %v554, %v562
    %v565 = vunpack.c.l.s4 1966171168
    %v566 = vunpack.c.0.s8 %v565
    %v567 = vlaneseq
    %v568 = vshrl.u32 %v567, 7
    %v569 = vsub.s32 %v566, %v568
    %v570 = vrot.slane %v556, %v569
    %v571 = vcombine.high %v563, %v563
    %v572 = vcombine.high %v570, %v570
    %v574 = vunpack.c.l.s4 1966171168
    %v575 = vunpack.c.0.s8 %v574
    %v576 = vlaneseq
    %v577 = vshrl.u32 %v576, 7
    %v578 = vsub.s32 %v575, %v577
    %v579 = vrot.slane %v563, %v578
    %v581 = vunpack.c.l.s4 1966171168
    %v582 = vunpack.c.0.s8 %v581
    %v583 = vlaneseq
    %v584 = vshrl.u32 %v583, 7
    %v585 = vsub.s32 %v582, %v584
    %v586 = vrot.slane %v570, %v585
    %v588 = vunpack.c.l.s4 1966171168
    %v589 = vunpack.c.0.s8 %v588
    %v590 = vlaneseq
    %v591 = vshrl.u32 %v590, 7
    %v592 = vsub.s32 %v589, %v591
    %v593 = vrot.slane %v571, %v592
    %v595 = vunpack.c.l.s4 1966171168
    %v596 = vunpack.c.0.s8 %v595
    %v597 = vlaneseq
    %v598 = vshrl.u32 %v597, 7
    %v599 = vsub.s32 %v596, %v598
    %v600 = vrot.slane %v572, %v599
    %v601 = vcombine.high %v579, %v579
    %v602 = vcombine.high %v586, %v586
    %v603 = vcombine.high %v593, %v593
    %v604 = vcombine.high %v600, %v600
    %s613 = sadd.s32 0, 40
    %s614 = scalar_lea.vmem [#allocation9], %s613
    %615 = vst [vmem:[%s614] sm:$0x1] %v579
    %616 = vst [vmem:[%s614 + $0x1] sm:$0x1] %v593
    %617 = vst [vmem:[%s614 + $0x2] sm:$0x1] %v601
    %618 = vst [vmem:[%s614 + $0x3] sm:$0x1] %v603
    %619 = vst [vmem:[%s614 + $0x4] sm:$0x1] %v586
    %620 = vst [vmem:[%s614 + $0x5] sm:$0x1] %v600
    %621 = vst [vmem:[%s614 + $0x6] sm:$0x1] %v602
    %622 = vst [vmem:[%s614 + $0x7] sm:$0x1] %v604
    %v623 = vsub.f32 %v546, 0.999
    %v624 = vsub.f32 %v547, 0.999
    %v625 = vsel %vm548, %v623, %v546
    %v626 = vsel %vm549, %v624, %v547
    %v627 = vadd.f32 %v625, %v139
    %v628 = vadd.f32 %v626, %v140
    %vm629 = vcmp.gt.f32.partialorder %v627, 0.999
    %vm630 = vcmp.gt.f32.partialorder %v628, 0.999
    %v631 = vsel %vm629, 1, 0
    %v632 = vsel %vm630, 1, 0
    %v633 = vcvt.s32.f32 %v631
    %v634 = vcvt.s32.f32 %v632
    %v635 = vpack.c.bf16 %v634, %v633
    %v637 = vcombine.high %v635, %v635
    %v639 = vunpack.c.l.s4 1966171168
    %v640 = vunpack.c.0.s8 %v639
    %v641 = vlaneseq
    %v642 = vshrl.u32 %v641, 7
    %v643 = vsub.s32 %v640, %v642
    %v644 = vrot.slane %v635, %v643
    %v646 = vunpack.c.l.s4 1966171168
    %v647 = vunpack.c.0.s8 %v646
    %v648 = vlaneseq
    %v649 = vshrl.u32 %v648, 7
    %v650 = vsub.s32 %v647, %v649
    %v651 = vrot.slane %v637, %v650
    %v652 = vcombine.high %v644, %v644
    %v653 = vcombine.high %v651, %v651
    %v655 = vunpack.c.l.s4 1966171168
    %v656 = vunpack.c.0.s8 %v655
    %v657 = vlaneseq
    %v658 = vshrl.u32 %v657, 7
    %v659 = vsub.s32 %v656, %v658
    %v660 = vrot.slane %v644, %v659
    %v662 = vunpack.c.l.s4 1966171168
    %v663 = vunpack.c.0.s8 %v662
    %v664 = vlaneseq
    %v665 = vshrl.u32 %v664, 7
    %v666 = vsub.s32 %v663, %v665
    %v667 = vrot.slane %v651, %v666
    %v669 = vunpack.c.l.s4 1966171168
    %v670 = vunpack.c.0.s8 %v669
    %v671 = vlaneseq
    %v672 = vshrl.u32 %v671, 7
    %v673 = vsub.s32 %v670, %v672
    %v674 = vrot.slane %v652, %v673
    %v676 = vunpack.c.l.s4 1966171168
    %v677 = vunpack.c.0.s8 %v676
    %v678 = vlaneseq
    %v679 = vshrl.u32 %v678, 7
    %v680 = vsub.s32 %v677, %v679
    %v681 = vrot.slane %v653, %v680
    %v682 = vcombine.high %v660, %v660
    %v683 = vcombine.high %v667, %v667
    %v684 = vcombine.high %v674, %v674
    %v685 = vcombine.high %v681, %v681
    %s694 = sadd.s32 0, 48
    %s695 = scalar_lea.vmem [#allocation9], %s694
    %696 = vst [vmem:[%s695] sm:$0x1] %v660
    %697 = vst [vmem:[%s695 + $0x1] sm:$0x1] %v674
    %698 = vst [vmem:[%s695 + $0x2] sm:$0x1] %v682
    %699 = vst [vmem:[%s695 + $0x3] sm:$0x1] %v684
    %700 = vst [vmem:[%s695 + $0x4] sm:$0x1] %v667
    %701 = vst [vmem:[%s695 + $0x5] sm:$0x1] %v681
    %702 = vst [vmem:[%s695 + $0x6] sm:$0x1] %v683
    %703 = vst [vmem:[%s695 + $0x7] sm:$0x1] %v685
    %v704 = vsub.f32 %v627, 0.999
    %v705 = vsub.f32 %v628, 0.999
    %v706 = vsel %vm629, %v704, %v627
    %v707 = vsel %vm630, %v705, %v628
    %v708 = vadd.f32 %v706, %v139
    %v709 = vadd.f32 %v707, %v140
    %vm710 = vcmp.gt.f32.partialorder %v708, 0.999
    %vm711 = vcmp.gt.f32.partialorder %v709, 0.999
    %v712 = vsel %vm710, 1, 0
    %v713 = vsel %vm711, 1, 0
    %v714 = vcvt.s32.f32 %v712
    %v715 = vcvt.s32.f32 %v713
    %v716 = vpack.c.bf16 %v715, %v714
    %v718 = vcombine.high %v716, %v716
    %v720 = vunpack.c.l.s4 1966171168
    %v721 = vunpack.c.0.s8 %v720
    %v722 = vlaneseq
    %v723 = vshrl.u32 %v722, 7
    %v724 = vsub.s32 %v721, %v723
    %v725 = vrot.slane %v716, %v724
    %v727 = vunpack.c.l.s4 1966171168
    %v728 = vunpack.c.0.s8 %v727
    %v729 = vlaneseq
    %v730 = vshrl.u32 %v729, 7
    %v731 = vsub.s32 %v728, %v730
    %v732 = vrot.slane %v718, %v731
    %v733 = vcombine.high %v725, %v725
    %v734 = vcombine.high %v732, %v732
    %v736 = vunpack.c.l.s4 1966171168
    %v737 = vunpack.c.0.s8 %v736
    %v738 = vlaneseq
    %v739 = vshrl.u32 %v738, 7
    %v740 = vsub.s32 %v737, %v739
    %v741 = vrot.slane %v725, %v740
    %v743 = vunpack.c.l.s4 1966171168
    %v744 = vunpack.c.0.s8 %v743
    %v745 = vlaneseq
    %v746 = vshrl.u32 %v745, 7
    %v747 = vsub.s32 %v744, %v746
    %v748 = vrot.slane %v732, %v747
    %v750 = vunpack.c.l.s4 1966171168
    %v751 = vunpack.c.0.s8 %v750
    %v752 = vlaneseq
    %v753 = vshrl.u32 %v752, 7
    %v754 = vsub.s32 %v751, %v753
    %v755 = vrot.slane %v733, %v754
    %v757 = vunpack.c.l.s4 1966171168
    %v758 = vunpack.c.0.s8 %v757
    %v759 = vlaneseq
    %v760 = vshrl.u32 %v759, 7
    %v761 = vsub.s32 %v758, %v760
    %v762 = vrot.slane %v734, %v761
    %v763 = vcombine.high %v741, %v741
    %v764 = vcombine.high %v748, %v748
    %v765 = vcombine.high %v755, %v755
    %v766 = vcombine.high %v762, %v762
    %s775 = sadd.s32 0, 56
    %s776 = scalar_lea.vmem [#allocation9], %s775
    %777 = vst [vmem:[%s776] sm:$0x1] %v741
    %778 = vst [vmem:[%s776 + $0x1] sm:$0x1] %v755
    %779 = vst [vmem:[%s776 + $0x2] sm:$0x1] %v763
    %780 = vst [vmem:[%s776 + $0x3] sm:$0x1] %v765
    %781 = vst [vmem:[%s776 + $0x4] sm:$0x1] %v748
    %782 = vst [vmem:[%s776 + $0x5] sm:$0x1] %v762
    %783 = vst [vmem:[%s776 + $0x6] sm:$0x1] %v764
    %784 = vst [vmem:[%s776 + $0x7] sm:$0x1] %v766
    %v785 = vsub.f32 %v708, 0.999
    %v786 = vsub.f32 %v709, 0.999
    %v787 = vsel %vm710, %v785, %v708
    %v788 = vsel %vm711, %v786, %v709
    %789 = vst [vmem:[#allocation2] sm:$0xff] %v787
    %790 = vst [vmem:[#allocation2 + $0x8] sm:$0xff] %v788
    // Predicated region
    $region30: #{tpu_custom_call.1} parent=1 // pred_check
      _
    $region31: #{tpu_custom_call.1} parent=1 // pred_check_branch
      %792 = sbr.rel (0) target = $region33
    $region32: #{tpu_custom_call.1} parent=1 // pred_region
      #allocation11 [shape = 'u32[6]{0}', space=smem, size = 0x18, scoped, tag = 'DMA stride descriptor']
      %s794 = ssub.s32 1024, 128
      %795 = vsyncadd [#allocation6], %s794
      %s797 = sshll.u32 1, 14
      %s798 = sxor.u32 4294967295, %s797
      %s801 = sshll.u32 7, 18
      %s802 = sxor.u32 4294967295, %s801
      %s803 = sand.u32 0, %s802
      %s805 = sor.u32 %s803, 0
      %s807 = sshll.u32 3, 24
      %s808 = sxor.u32 4294967295, %s807
      %s809 = sand.u32 %s805, %s808
      %s811 = sor.u32 %s809, 0
      %s812 = sshll.u32 [#allocation9], 4
      %s813 = int_to_ptr.vmem [resolvable:$true] %s812
      %819 = sst [smem:[#allocation11]] 128
      %s820 = scalar_lea.smem [#allocation11], 1
      %821 = sst [smem:[%s820]] 16
      %s822 = scalar_lea.smem [#allocation11], 2
      %823 = sst [smem:[%s822]] 1
      %s824 = scalar_lea.smem [#allocation11], 3
      %825 = sst [smem:[%s824]] 16
      %s826 = scalar_lea.smem [#allocation11], 4
      %827 = sst [smem:[%s826]] 16
      %s828 = scalar_lea.smem [#allocation11], 5
      %829 = sst [smem:[%s828]] 1
      %831 = dma.general %s813, 128, %s4, [#allocation6], [#allocation10], [#allocation11], %s811, 0
    $region33: #{tpu_custom_call.1} parent=1 // pred_fallthru
      _
    // Predicated region
    $region34: #{tpu_custom_call.1} parent=1 // pred_check
      _
    $region35: #{tpu_custom_call.1} parent=1 // pred_check_branch
      %833 = sbr.rel (0) target = $region37
    $region36: #{tpu_custom_call.1} parent=1 // pred_region
      %834 = dma.done [#allocation6], 1024
    $region37: #{tpu_custom_call.1} parent=1 // pred_fallthru
      _
    %835 = vsyncpa [#allocation5], 1
    %836 = vsyncpa [#allocation8], 1
    %837 = vsyncpa [#allocation6], 1

</llo_original>
